<compile_context>
chip_gen: v5e
topology: v5e:2x2
jax: 0.10.0
libtpu: 0.0.40
codegen_flags: <defaults>
</compile_context>

<pallas_src>
import jax
import jax.numpy as jnp
from jax.experimental import pallas as pl
from jax.experimental.pallas import tpu as pltpu


def basic_block_kernel(x_ref, w1_ref, w2_ref, b1_ref, b2_ref, mask_ref,
                       out_ref, pad2_ref, patch_ref):
  """One image per grid step.

  x_ref     : (1, C, PLANE)     zero-padded flat plane, PLANE = (H+3)*(W+2)
  w1_ref    : (Cmid, 9*C)       conv1 weights (BN1 scale folded), cols (kh,kw,ci)
  w2_ref    : (Cmid, 9*Cmid)    conv2 weights (BN2 scale folded), cols (kh,kw,ci)
  b1_/b2_ref: (Cmid, 1)         folded BN shifts (column vectors)
  mask_ref  : (1, H*(W+2))      1.0 on valid columns (w < W), 0.0 on junk cols
  out_ref   : (1, Cmid, H*(W+2))  channel-major output incl. junk columns
  pad2_ref  : VMEM (C, PLANE)   padded plane for conv2 (scratch)
  patch_ref : VMEM (9*C, H*(W+2)) im2col patch matrix (shared by both convs)
  """
  C = x_ref.shape[1]
  PLANE = x_ref.shape[2]
  HWp = out_ref.shape[2]
  Wp = (PLANE - HWp) // 3          # PLANE = (H+3)*Wp, HWp = H*Wp
  cdt = patch_ref.dtype

  xp = x_ref[0]                    # (C, PLANE), input dtype (f32)

  # ---- conv1: im2col = 9 contiguous lane slices of the padded plane ----
  for kh in range(3):
    for kw in range(3):
      t = kh * 3 + kw
      off = kh * Wp + kw
      patch_ref[t * C:(t + 1) * C, :] = xp[:, off:off + HWp].astype(cdt)

  h1 = jnp.dot(w1_ref[...], patch_ref[...],
               preferred_element_type=jnp.float32)            # (Cmid, HWp)
  h1 = jnp.maximum(h1 + b1_ref[...], 0.0)                     # bn1 shift + relu
  h1 = h1 * mask_ref[...]                                     # zero junk cols

  # ---- build the conv2 padded plane: halo-only zeroing + one big store ----
  # The masked junk columns of h1 land exactly on the interior halo columns,
  # so only the leading (top row + first left halo) and trailing (bottom pad
  # rows) strips need explicit zeroing each step.
  pad2_ref[:, 0:Wp + 1] = jnp.zeros((C, Wp + 1), cdt)
  pad2_ref[:, Wp + 1 + HWp:PLANE] = jnp.zeros((C, PLANE - HWp - Wp - 1), cdt)
  pad2_ref[:, Wp + 1:Wp + 1 + HWp] = h1.astype(cdt)

  # ---- conv2: same 9-slice im2col on the freshly built plane ----
  p2 = pad2_ref[...]
  for kh in range(3):
    for kw in range(3):
      t = kh * 3 + kw
      off = kh * Wp + kw
      patch_ref[t * C:(t + 1) * C, :] = p2[:, off:off + HWp]

  h2 = jnp.dot(w2_ref[...], patch_ref[...],
               preferred_element_type=jnp.float32)            # (Cmid, HWp)

  # ---- bn2 shift + residual + relu, all on the lane-dense layout ----
  res = xp[:, Wp + 1:Wp + 1 + HWp].astype(jnp.float32)        # residual slice
  out_ref[0] = jnp.maximum(h2 + b2_ref[...] + res, 0.0).astype(out_ref.dtype)


def basic_block_pallas(x_nchw, params, eps=1e-5, compute_dtype=jnp.float32):
  """BasicBlock forward (stride=1, downsample=None), eval-mode BatchNorm.

  compute_dtype: dtype of the matmul operands (plane / patches / weights).
    jnp.bfloat16 gives native MXU throughput on v6e/v7x and halves scratch
    VMEM (use a looser tolerance ~1e-2); default f32 matches the reference.
  """
  (w1, w2, g1, beta1, m1, v1, g2, beta2, m2, v2) = params
  N, C, H, W = x_nchw.shape
  Cmid = w1.shape[0]
  assert Cmid == C, "stride=1 / downsample=None requires in_planes == planes"

  Wp = W + 2                       # padded width
  Hp = H + 3                       # 1 top halo + 2 bottom (keeps taps in range)
  PLANE = Hp * Wp
  HWp = H * Wp

  # Single input copy: flat zero-padded plane (also provides the residual).
  x_plane = jnp.pad(x_nchw, ((0, 0), (0, 0), (1, 2), (1, 1))).reshape(N, C, PLANE)

  # Fold eval-mode BN: scale into the weights, keep only the shift.
  inv1 = g1 / jnp.sqrt(v1 + eps)
  inv2 = g2 / jnp.sqrt(v2 + eps)
  w1m = jnp.transpose(w1 * inv1[:, None, None, None],
                      (0, 2, 3, 1)).reshape(Cmid, 9 * C).astype(compute_dtype)
  w2m = jnp.transpose(w2 * inv2[:, None, None, None],
                      (0, 2, 3, 1)).reshape(Cmid, 9 * Cmid).astype(compute_dtype)
  b1 = (beta1 - m1 * inv1).reshape(Cmid, 1).astype(jnp.float32)
  b2 = (beta2 - m2 * inv2).reshape(Cmid, 1).astype(jnp.float32)

  # 1.0 on valid output columns (w < W), 0.0 on the 2 junk columns per row.
  col = jnp.arange(HWp, dtype=jnp.int32) % Wp
  mask = (col < W).astype(jnp.float32).reshape(1, HWp)

  out_wide = pl.pallas_call(
      basic_block_kernel,
      out_shape=jax.ShapeDtypeStruct((N, Cmid, HWp), x_nchw.dtype),
      grid_spec=pltpu.PrefetchScalarGridSpec(
          num_scalar_prefetch=0,
          grid=(N,),
          in_specs=[
              pl.BlockSpec((1, C, PLANE), lambda n: (n, 0, 0)),
              pl.BlockSpec((Cmid, 9 * C), lambda n: (0, 0)),
              pl.BlockSpec((Cmid, 9 * Cmid), lambda n: (0, 0)),
              pl.BlockSpec((Cmid, 1), lambda n: (0, 0)),
              pl.BlockSpec((Cmid, 1), lambda n: (0, 0)),
              pl.BlockSpec((1, HWp), lambda n: (0, 0)),
          ],
          out_specs=pl.BlockSpec((1, Cmid, HWp), lambda n: (n, 0, 0)),
          scratch_shapes=[
              pltpu.VMEM((C, PLANE), compute_dtype),     # conv2 padded plane
              pltpu.VMEM((9 * C, HWp), compute_dtype),   # im2col patch matrix
          ],
      ),
      compiler_params=pltpu.CompilerParams(
          dimension_semantics=("parallel",),
          vmem_limit_bytes=48 * 1024 * 1024),
  )(x_plane, w1m, w2m, b1, b2, mask)

  # Strip the 2 junk columns per row -> NCHW output (cheap lane-dim slice).
  return out_wide.reshape(N, Cmid, H, Wp)[:, :, :, :W]


def basic_block_reference(x_nchw, params, eps=1e-5):
  """Pure-JAX NCHW reference mirroring the PyTorch module (eval-mode BN)."""
  (w1, w2, g1, beta1, m1, v1, g2, beta2, m2, v2) = params

  def conv3x3(x, w):
    return jax.lax.conv_general_dilated(
        x, w, window_strides=(1, 1), padding=((1, 1), (1, 1)),
        dimension_numbers=("NCHW", "OIHW", "NCHW"))

  def bn(x, g, b, m, v):
    g = g.reshape(1, -1, 1, 1)
    b = b.reshape(1, -1, 1, 1)
    m = m.reshape(1, -1, 1, 1)
    v = v.reshape(1, -1, 1, 1)
    return (x - m) / jnp.sqrt(v + eps) * g + b

  residual = x_nchw
  out = conv3x3(x_nchw, w1)
  out = bn(out, g1, beta1, m1, v1)
  out = jnp.maximum(out, 0.0)
  out = conv3x3(out, w2)
  out = bn(out, g2, beta2, m2, v2)
  out = out + residual
  return jnp.maximum(out, 0.0)


def make_params(key, in_planes, planes):
  k1, k2, k3, k4 = jax.random.split(key, 4)
  w1 = jax.random.normal(k1, (planes, in_planes, 3, 3), jnp.float32) * 0.1
  w2 = jax.random.normal(k2, (planes, planes, 3, 3), jnp.float32) * 0.1
  g1 = 1.0 + 0.1 * jnp.arange(planes, dtype=jnp.float32)
  beta1 = 0.05 * jnp.arange(planes, dtype=jnp.float32)
  m1 = 0.2 * jax.random.normal(k3, (planes,), jnp.float32)
  v1 = 0.5 + 0.1 * jnp.arange(planes, dtype=jnp.float32)
  g2 = 1.0 - 0.05 * jnp.arange(planes, dtype=jnp.float32)
  beta2 = -0.03 * jnp.arange(planes, dtype=jnp.float32)
  m2 = 0.1 * jax.random.normal(k4, (planes,), jnp.float32)
  v2 = 1.0 + 0.05 * jnp.arange(planes, dtype=jnp.float32)
  return (w1, w2, g1, beta1, m1, v1, g2, beta2, m2, v2)


if __name__ == "__main__":
  key = jax.random.PRNGKey(0)
  kx, kp = jax.random.split(key)

  N, C, H, W = 2, 8, 16, 16           # in_planes = planes = 8, stride = 1
  x = jax.random.normal(kx, (N, C, H, W), jnp.float32)
  params = make_params(kp, C, C)

  out = jax.block_until_ready(basic_block_pallas(x, params))
  ref = jax.block_until_ready(basic_block_reference(x, params))

  assert out.shape == ref.shape == (N, C, H, W)
  assert jnp.allclose(out, ref, atol=1e-4, rtol=1e-4), (
      float(jnp.max(jnp.abs(out - ref))))
  print("KERNEL_OK")
</pallas_src>

<mosaic_0001>
module attributes {stable_mosaic.version = 11 : i64} {
  func.func @basic_block_kernel(%arg0: i32, %arg1: memref<1x8x342xf32, #tpu.memory_space<vmem>>, %arg2: memref<8x72xf32, #tpu.memory_space<vmem>>, %arg3: memref<8x72xf32, #tpu.memory_space<vmem>>, %arg4: memref<8x1xf32, #tpu.memory_space<vmem>>, %arg5: memref<8x1xf32, #tpu.memory_space<vmem>>, %arg6: memref<1x288xf32, #tpu.memory_space<vmem>>, %arg7: memref<1x8x288xf32, #tpu.memory_space<vmem>>, %arg8: memref<8x342xf32, #tpu.memory_space<vmem>>, %arg9: memref<72x288xf32, #tpu.memory_space<vmem>>) attributes {dimension_semantics = [#tpu.dimension_semantics<parallel>], iteration_bounds = array<i64: 2>, scalar_prefetch = 0 : i64, scratch_operands = 2 : i64, tpu.core_type = #tpu.core_type<tc>, window_params = [{transform_indices = @transform_0, window_bounds = array<i64: 1, 8, 342>}, {pipeline_mode = #tpu.pipeline_mode<synchronous>, transform_indices = @transform_1, window_bounds = array<i64: 8, 72>}, {pipeline_mode = #tpu.pipeline_mode<synchronous>, transform_indices = @transform_2, window_bounds = array<i64: 8, 72>}, {pipeline_mode = #tpu.pipeline_mode<synchronous>, transform_indices = @transform_3, window_bounds = array<i64: 8, 1>}, {pipeline_mode = #tpu.pipeline_mode<synchronous>, transform_indices = @transform_4, window_bounds = array<i64: 8, 1>}, {pipeline_mode = #tpu.pipeline_mode<synchronous>, transform_indices = @transform_5, window_bounds = array<i64: 1, 288>}, {transform_indices = @transform_6, window_bounds = array<i64: 1, 8, 288>}]} {
    %c0 = arith.constant 0 : index
    %c0_0 = arith.constant 0 : index
    %c0_1 = arith.constant 0 : index
    %0 = vector.load %arg1[%c0, %c0_0, %c0_1] : memref<1x8x342xf32, #tpu.memory_space<vmem>>, vector<1x8x342xf32>
    %1 = vector.shape_cast %0 : vector<1x8x342xf32> to vector<8x342xf32>
    %2 = vector.extract_strided_slice %1 {offsets = [0, 0], sizes = [8, 288], strides = [1, 1]} : vector<8x342xf32> to vector<8x288xf32>
    %c0_2 = arith.constant 0 : index
    %c0_3 = arith.constant 0 : index
    %3 = vector.load %arg9[%c0_2, %c0_3] : memref<72x288xf32, #tpu.memory_space<vmem>>, vector<8x288xf32>
    tpu.vector_store %arg9[%c0_2, %c0_3], %2 {strides = array<i32>} : memref<72x288xf32, #tpu.memory_space<vmem>>, vector<8x288xf32>,
    %4 = vector.extract_strided_slice %1 {offsets = [0, 1], sizes = [8, 288], strides = [1, 1]} : vector<8x342xf32> to vector<8x288xf32>
    %c8 = arith.constant 8 : index
    %c0_4 = arith.constant 0 : index
    %5 = vector.load %arg9[%c8, %c0_4] : memref<72x288xf32, #tpu.memory_space<vmem>>, vector<8x288xf32>
    tpu.vector_store %arg9[%c8, %c0_4], %4 {strides = array<i32>} : memref<72x288xf32, #tpu.memory_space<vmem>>, vector<8x288xf32>,
    %6 = vector.extract_strided_slice %1 {offsets = [0, 2], sizes = [8, 288], strides = [1, 1]} : vector<8x342xf32> to vector<8x288xf32>
    %c16 = arith.constant 16 : index
    %c0_5 = arith.constant 0 : index
    %7 = vector.load %arg9[%c16, %c0_5] : memref<72x288xf32, #tpu.memory_space<vmem>>, vector<8x288xf32>
    tpu.vector_store %arg9[%c16, %c0_5], %6 {strides = array<i32>} : memref<72x288xf32, #tpu.memory_space<vmem>>, vector<8x288xf32>,
    %8 = vector.extract_strided_slice %1 {offsets = [0, 18], sizes = [8, 288], strides = [1, 1]} : vector<8x342xf32> to vector<8x288xf32>
    %c24 = arith.constant 24 : index
    %c0_6 = arith.constant 0 : index
    %9 = vector.load %arg9[%c24, %c0_6] : memref<72x288xf32, #tpu.memory_space<vmem>>, vector<8x288xf32>
    tpu.vector_store %arg9[%c24, %c0_6], %8 {strides = array<i32>} : memref<72x288xf32, #tpu.memory_space<vmem>>, vector<8x288xf32>,
    %10 = vector.extract_strided_slice %1 {offsets = [0, 19], sizes = [8, 288], strides = [1, 1]} : vector<8x342xf32> to vector<8x288xf32>
    %c32 = arith.constant 32 : index
    %c0_7 = arith.constant 0 : index
    %11 = vector.load %arg9[%c32, %c0_7] : memref<72x288xf32, #tpu.memory_space<vmem>>, vector<8x288xf32>
    tpu.vector_store %arg9[%c32, %c0_7], %10 {strides = array<i32>} : memref<72x288xf32, #tpu.memory_space<vmem>>, vector<8x288xf32>,
    %12 = vector.extract_strided_slice %1 {offsets = [0, 20], sizes = [8, 288], strides = [1, 1]} : vector<8x342xf32> to vector<8x288xf32>
    %c40 = arith.constant 40 : index
    %c0_8 = arith.constant 0 : index
    %13 = vector.load %arg9[%c40, %c0_8] : memref<72x288xf32, #tpu.memory_space<vmem>>, vector<8x288xf32>
    tpu.vector_store %arg9[%c40, %c0_8], %12 {strides = array<i32>} : memref<72x288xf32, #tpu.memory_space<vmem>>, vector<8x288xf32>,
    %14 = vector.extract_strided_slice %1 {offsets = [0, 36], sizes = [8, 288], strides = [1, 1]} : vector<8x342xf32> to vector<8x288xf32>
    %c48 = arith.constant 48 : index
    %c0_9 = arith.constant 0 : index
    %15 = vector.load %arg9[%c48, %c0_9] : memref<72x288xf32, #tpu.memory_space<vmem>>, vector<8x288xf32>
    tpu.vector_store %arg9[%c48, %c0_9], %14 {strides = array<i32>} : memref<72x288xf32, #tpu.memory_space<vmem>>, vector<8x288xf32>,
    %16 = vector.extract_strided_slice %1 {offsets = [0, 37], sizes = [8, 288], strides = [1, 1]} : vector<8x342xf32> to vector<8x288xf32>
    %c56 = arith.constant 56 : index
    %c0_10 = arith.constant 0 : index
    %17 = vector.load %arg9[%c56, %c0_10] : memref<72x288xf32, #tpu.memory_space<vmem>>, vector<8x288xf32>
    tpu.vector_store %arg9[%c56, %c0_10], %16 {strides = array<i32>} : memref<72x288xf32, #tpu.memory_space<vmem>>, vector<8x288xf32>,
    %18 = vector.extract_strided_slice %1 {offsets = [0, 38], sizes = [8, 288], strides = [1, 1]} : vector<8x342xf32> to vector<8x288xf32>
    %c64 = arith.constant 64 : index
    %c0_11 = arith.constant 0 : index
    %19 = vector.load %arg9[%c64, %c0_11] : memref<72x288xf32, #tpu.memory_space<vmem>>, vector<8x288xf32>
    tpu.vector_store %arg9[%c64, %c0_11], %18 {strides = array<i32>} : memref<72x288xf32, #tpu.memory_space<vmem>>, vector<8x288xf32>,
    %c0_12 = arith.constant 0 : index
    %c0_13 = arith.constant 0 : index
    %20 = vector.load %arg2[%c0_12, %c0_13] : memref<8x72xf32, #tpu.memory_space<vmem>>, vector<8x72xf32>
    %c0_14 = arith.constant 0 : index
    %c0_15 = arith.constant 0 : index
    %21 = vector.load %arg9[%c0_14, %c0_15] : memref<72x288xf32, #tpu.memory_space<vmem>>, vector<72x288xf32>
    %cst = arith.constant dense<0.000000e+00> : vector<8x288xf32>
    %22 = tpu.matmul %20, %21, %cst {dimension_numbers = #tpu.dot_dimension_numbers<[1], [0], [0], [1], [0, 0, 1, 1], [], []>} : vector<8x72xf32>, vector<72x288xf32>, vector<8x288xf32> -> vector<8x288xf32>
    %c0_16 = arith.constant 0 : index
    %c0_17 = arith.constant 0 : index
    %23 = vector.load %arg4[%c0_16, %c0_17] : memref<8x1xf32, #tpu.memory_space<vmem>>, vector<8x1xf32>
    %24 = vector.broadcast %23 : vector<8x1xf32> to vector<8x288xf32>
    %25 = arith.addf %22, %24 : vector<8x288xf32>
    %cst_18 = arith.constant 0.000000e+00 : f32
    %26 = vector.broadcast %cst_18 : f32 to vector<8x288xf32>
    %27 = arith.maximumf %25, %26 : vector<8x288xf32>
    %c0_19 = arith.constant 0 : index
    %c0_20 = arith.constant 0 : index
    %28 = vector.load %arg6[%c0_19, %c0_20] : memref<1x288xf32, #tpu.memory_space<vmem>>, vector<1x288xf32>
    %29 = vector.broadcast %28 : vector<1x288xf32> to vector<8x288xf32>
    %30 = arith.mulf %27, %29 : vector<8x288xf32>
    %cst_21 = arith.constant 0.000000e+00 : f32
    %31 = vector.broadcast %cst_21 : f32 to vector<8x19xf32>
    %c0_22 = arith.constant 0 : index
    %c0_23 = arith.constant 0 : index
    %32 = vector.load %arg8[%c0_22, %c0_23] : memref<8x342xf32, #tpu.memory_space<vmem>>, vector<8x19xf32>
    tpu.vector_store %arg8[%c0_22, %c0_23], %31 {strides = array<i32>} : memref<8x342xf32, #tpu.memory_space<vmem>>, vector<8x19xf32>,
    %cst_24 = arith.constant 0.000000e+00 : f32
    %33 = vector.broadcast %cst_24 : f32 to vector<8x35xf32>
    %c0_25 = arith.constant 0 : index
    %c307 = arith.constant 307 : index
    %34 = vector.load %arg8[%c0_25, %c307] : memref<8x342xf32, #tpu.memory_space<vmem>>, vector<8x35xf32>
    tpu.vector_store %arg8[%c0_25, %c307], %33 {strides = array<i32>} : memref<8x342xf32, #tpu.memory_space<vmem>>, vector<8x35xf32>,
    %c0_26 = arith.constant 0 : index
    %c19 = arith.constant 19 : index
    %35 = vector.load %arg8[%c0_26, %c19] : memref<8x342xf32, #tpu.memory_space<vmem>>, vector<8x288xf32>
    tpu.vector_store %arg8[%c0_26, %c19], %30 {strides = array<i32>} : memref<8x342xf32, #tpu.memory_space<vmem>>, vector<8x288xf32>,
    %c0_27 = arith.constant 0 : index
    %c0_28 = arith.constant 0 : index
    %36 = vector.load %arg8[%c0_27, %c0_28] : memref<8x342xf32, #tpu.memory_space<vmem>>, vector<8x342xf32>
    %37 = vector.extract_strided_slice %36 {offsets = [0, 0], sizes = [8, 288], strides = [1, 1]} : vector<8x342xf32> to vector<8x288xf32>
    %c0_29 = arith.constant 0 : index
    %c0_30 = arith.constant 0 : index
    %38 = vector.load %arg9[%c0_29, %c0_30] : memref<72x288xf32, #tpu.memory_space<vmem>>, vector<8x288xf32>
    tpu.vector_store %arg9[%c0_29, %c0_30], %37 {strides = array<i32>} : memref<72x288xf32, #tpu.memory_space<vmem>>, vector<8x288xf32>,
    %39 = vector.extract_strided_slice %36 {offsets = [0, 1], sizes = [8, 288], strides = [1, 1]} : vector<8x342xf32> to vector<8x288xf32>
    %c8_31 = arith.constant 8 : index
    %c0_32 = arith.constant 0 : index
    %40 = vector.load %arg9[%c8_31, %c0_32] : memref<72x288xf32, #tpu.memory_space<vmem>>, vector<8x288xf32>
    tpu.vector_store %arg9[%c8_31, %c0_32], %39 {strides = array<i32>} : memref<72x288xf32, #tpu.memory_space<vmem>>, vector<8x288xf32>,
    %41 = vector.extract_strided_slice %36 {offsets = [0, 2], sizes = [8, 288], strides = [1, 1]} : vector<8x342xf32> to vector<8x288xf32>
    %c16_33 = arith.constant 16 : index
    %c0_34 = arith.constant 0 : index
    %42 = vector.load %arg9[%c16_33, %c0_34] : memref<72x288xf32, #tpu.memory_space<vmem>>, vector<8x288xf32>
    tpu.vector_store %arg9[%c16_33, %c0_34], %41 {strides = array<i32>} : memref<72x288xf32, #tpu.memory_space<vmem>>, vector<8x288xf32>,
    %43 = vector.extract_strided_slice %36 {offsets = [0, 18], sizes = [8, 288], strides = [1, 1]} : vector<8x342xf32> to vector<8x288xf32>
    %c24_35 = arith.constant 24 : index
    %c0_36 = arith.constant 0 : index
    %44 = vector.load %arg9[%c24_35, %c0_36] : memref<72x288xf32, #tpu.memory_space<vmem>>, vector<8x288xf32>
    tpu.vector_store %arg9[%c24_35, %c0_36], %43 {strides = array<i32>} : memref<72x288xf32, #tpu.memory_space<vmem>>, vector<8x288xf32>,
    %45 = vector.extract_strided_slice %36 {offsets = [0, 19], sizes = [8, 288], strides = [1, 1]} : vector<8x342xf32> to vector<8x288xf32>
    %c32_37 = arith.constant 32 : index
    %c0_38 = arith.constant 0 : index
    %46 = vector.load %arg9[%c32_37, %c0_38] : memref<72x288xf32, #tpu.memory_space<vmem>>, vector<8x288xf32>
    tpu.vector_store %arg9[%c32_37, %c0_38], %45 {strides = array<i32>} : memref<72x288xf32, #tpu.memory_space<vmem>>, vector<8x288xf32>,
    %47 = vector.extract_strided_slice %36 {offsets = [0, 20], sizes = [8, 288], strides = [1, 1]} : vector<8x342xf32> to vector<8x288xf32>
    %c40_39 = arith.constant 40 : index
    %c0_40 = arith.constant 0 : index
    %48 = vector.load %arg9[%c40_39, %c0_40] : memref<72x288xf32, #tpu.memory_space<vmem>>, vector<8x288xf32>
    tpu.vector_store %arg9[%c40_39, %c0_40], %47 {strides = array<i32>} : memref<72x288xf32, #tpu.memory_space<vmem>>, vector<8x288xf32>,
    %49 = vector.extract_strided_slice %36 {offsets = [0, 36], sizes = [8, 288], strides = [1, 1]} : vector<8x342xf32> to vector<8x288xf32>
    %c48_41 = arith.constant 48 : index
    %c0_42 = arith.constant 0 : index
    %50 = vector.load %arg9[%c48_41, %c0_42] : memref<72x288xf32, #tpu.memory_space<vmem>>, vector<8x288xf32>
    tpu.vector_store %arg9[%c48_41, %c0_42], %49 {strides = array<i32>} : memref<72x288xf32, #tpu.memory_space<vmem>>, vector<8x288xf32>,
    %51 = vector.extract_strided_slice %36 {offsets = [0, 37], sizes = [8, 288], strides = [1, 1]} : vector<8x342xf32> to vector<8x288xf32>
    %c56_43 = arith.constant 56 : index
    %c0_44 = arith.constant 0 : index
    %52 = vector.load %arg9[%c56_43, %c0_44] : memref<72x288xf32, #tpu.memory_space<vmem>>, vector<8x288xf32>
    tpu.vector_store %arg9[%c56_43, %c0_44], %51 {strides = array<i32>} : memref<72x288xf32, #tpu.memory_space<vmem>>, vector<8x288xf32>,
    %53 = vector.extract_strided_slice %36 {offsets = [0, 38], sizes = [8, 288], strides = [1, 1]} : vector<8x342xf32> to vector<8x288xf32>
    %c64_45 = arith.constant 64 : index
    %c0_46 = arith.constant 0 : index
    %54 = vector.load %arg9[%c64_45, %c0_46] : memref<72x288xf32, #tpu.memory_space<vmem>>, vector<8x288xf32>
    tpu.vector_store %arg9[%c64_45, %c0_46], %53 {strides = array<i32>} : memref<72x288xf32, #tpu.memory_space<vmem>>, vector<8x288xf32>,
    %c0_47 = arith.constant 0 : index
    %c0_48 = arith.constant 0 : index
    %55 = vector.load %arg3[%c0_47, %c0_48] : memref<8x72xf32, #tpu.memory_space<vmem>>, vector<8x72xf32>
    %c0_49 = arith.constant 0 : index
    %c0_50 = arith.constant 0 : index
    %56 = vector.load %arg9[%c0_49, %c0_50] : memref<72x288xf32, #tpu.memory_space<vmem>>, vector<72x288xf32>
    %cst_51 = arith.constant dense<0.000000e+00> : vector<8x288xf32>
    %57 = tpu.matmul %55, %56, %cst_51 {dimension_numbers = #tpu.dot_dimension_numbers<[1], [0], [0], [1], [0, 0, 1, 1], [], []>} : vector<8x72xf32>, vector<72x288xf32>, vector<8x288xf32> -> vector<8x288xf32>
    %58 = vector.extract_strided_slice %1 {offsets = [0, 19], sizes = [8, 288], strides = [1, 1]} : vector<8x342xf32> to vector<8x288xf32>
    %c0_52 = arith.constant 0 : index
    %c0_53 = arith.constant 0 : index
    %59 = vector.load %arg5[%c0_52, %c0_53] : memref<8x1xf32, #tpu.memory_space<vmem>>, vector<8x1xf32>
    %60 = vector.broadcast %59 : vector<8x1xf32> to vector<8x288xf32>
    %61 = arith.addf %57, %60 : vector<8x288xf32>
    %62 = arith.addf %61, %58 : vector<8x288xf32>
    %cst_54 = arith.constant 0.000000e+00 : f32
    %63 = vector.broadcast %cst_54 : f32 to vector<8x288xf32>
    %64 = arith.maximumf %62, %63 : vector<8x288xf32>
    %c0_55 = arith.constant 0 : index
    %c0_56 = arith.constant 0 : index
    %c0_57 = arith.constant 0 : index
    %65 = vector.load %arg7[%c0_55, %c0_56, %c0_57] : memref<1x8x288xf32, #tpu.memory_space<vmem>>, vector<1x8x288xf32>
    %66 = vector.shape_cast %65 : vector<1x8x288xf32> to vector<8x288xf32>
    %67 = vector.shape_cast %64 : vector<8x288xf32> to vector<1x8x288xf32>
    tpu.vector_store %arg7[%c0_55, %c0_56, %c0_57], %67 {strides = array<i32>} : memref<1x8x288xf32, #tpu.memory_space<vmem>>, vector<1x8x288xf32>,
    return
  }
  func.func @transform_0(%arg0: i32) -> (i32, i32, i32) {
    %c0_i32 = arith.constant 0 : i32
    %c0_i32_0 = arith.constant 0 : i32
    %c0_i32_1 = arith.constant 0 : i32
    return %arg0, %c0_i32, %c0_i32_0 : i32, i32, i32
  }
  func.func @transform_1(%arg0: i32) -> (i32, i32) {
    %c0_i32 = arith.constant 0 : i32
    %c0_i32_0 = arith.constant 0 : i32
    %c0_i32_1 = arith.constant 0 : i32
    return %c0_i32, %c0_i32_0 : i32, i32
  }
  func.func @transform_2(%arg0: i32) -> (i32, i32) {
    %c0_i32 = arith.constant 0 : i32
    %c0_i32_0 = arith.constant 0 : i32
    %c0_i32_1 = arith.constant 0 : i32
    return %c0_i32, %c0_i32_0 : i32, i32
  }
  func.func @transform_3(%arg0: i32) -> (i32, i32) {
    %c0_i32 = arith.constant 0 : i32
    %c0_i32_0 = arith.constant 0 : i32
    %c0_i32_1 = arith.constant 0 : i32
    return %c0_i32, %c0_i32_0 : i32, i32
  }
  func.func @transform_4(%arg0: i32) -> (i32, i32) {
    %c0_i32 = arith.constant 0 : i32
    %c0_i32_0 = arith.constant 0 : i32
    %c0_i32_1 = arith.constant 0 : i32
    return %c0_i32, %c0_i32_0 : i32, i32
  }
  func.func @transform_5(%arg0: i32) -> (i32, i32) {
    %c0_i32 = arith.constant 0 : i32
    %c0_i32_0 = arith.constant 0 : i32
    %c0_i32_1 = arith.constant 0 : i32
    return %c0_i32, %c0_i32_0 : i32, i32
  }
  func.func @transform_6(%arg0: i32) -> (i32, i32, i32) {
    %c0_i32 = arith.constant 0 : i32
    %c0_i32_0 = arith.constant 0 : i32
    %c0_i32_1 = arith.constant 0 : i32
    return %arg0, %c0_i32, %c0_i32_0 : i32, i32, i32
  }
}

</mosaic_0001>

<llo_original>
// kernel: tpu_custom_call.1
$region0: #{tpu_custom_call.1}
  #allocation0 [shape = 'u32[]', space=smem, size = 0x4, offset = 0x4, fixed_abs, tag = 'smem constant byte address 0x4 - core index']
  #allocation1 [shape = 'u32[72,128]{1,0:T(1,128)}', space=vmem, size = 0x9000, scoped, tag = 'internal scratch']
  #allocation2 [shape = 'f32[8,342]{1,0:T(8,128)}', space=vmem, size = 0x3000, scoped, tag = 'scratch operand']
  #allocation3 [shape = 'f32[72,288]{1,0:T(8,128)}', space=vmem, size = 0x1b000, scoped, tag = 'scratch operand']
  %s0 = inlined_call_operand.hbm [shape: f32[2,8,342], index: 0, kind: input, shape index: {}]
  %s1 = inlined_call_operand.vmem [shape: f32[8,72], index: 1, kind: input, shape index: {}]
  %s2 = inlined_call_operand.vmem [shape: f32[8,72], index: 2, kind: input, shape index: {}]
  %s3 = inlined_call_operand.vmem [shape: f32[8,1], index: 3, kind: input, shape index: {}]
  %s4 = inlined_call_operand.vmem [shape: f32[8,1], index: 4, kind: input, shape index: {}]
  %s5 = inlined_call_operand.vmem [shape: f32[1,288], index: 5, kind: input, shape index: {}]
  %s6 = inlined_call_operand.hbm [shape: f32[2,8,288], index: 6, kind: output, shape index: {}]
  %s7 = sld [smem:[#allocation0]]
  $region61: #{tpu_custom_call.1} parent=0
    _
  %s9 = ssub.s32 1, %s7
  %s10 = scalar_select 0, %s9, %s7
  $region1: #{tpu_custom_call.1} parent=0
    #allocation4 [shape = 'u8[24576]{0}', space=vmem, size = 0x6000, scoped, tag = 'input window, operand 0']
    #allocation5 [shape = 's32[2]{0}', space=sflag, size = 0x8, scoped, tag = 'scoped memory for tpu_custom_call.1']
    #allocation6 [shape = 's32[2]{0}', space=sflag, size = 0x8, scoped, tag = 'scoped memory for tpu_custom_call.1']
    #allocation7 [shape = 'u8[24576]{0}', space=vmem, size = 0x6000, scoped, tag = 'output window, operand 0']
    %11 = vsyncpa [#allocation5], 0
    %s12 = scalar_lea.sflag [#allocation5], 1
    %13 = vsyncpa %s12, 0
    %14 = vsyncpa [#allocation6], 0
    %s15 = scalar_lea.sflag [#allocation6], 1
    %16 = vsyncpa %s15, 0
    loop: start=0, step=1, limit=4
    $region2: #{tpu_custom_call.1} parent=1 // loop_pre_header
      _
    $region3: #{tpu_custom_call.1} parent=1 // loop_header
      %s18 = sphi 0, %s22
      %p19 = scmp.ge.s32.totalorder %s18, 4
      %s28 = sphi 0, %s30
      %s31 = sphi 0, %s28
      %s32 = sphi 0, %s31
      %s48 = sphi 0, %s32
      %s52 = sphi 0, %s52
      %s54 = sphi 0, %s52
      %s55 = sphi 0, %s54
      %s69 = sphi 0, %s55
      %s73 = sphi 0, %s73
      %s75 = sphi 0, %s73
      %s76 = sphi 0, %s75
      %s90 = sphi 0, %s76
      %s94 = sphi 0, %s94
      %s96 = sphi 0, %s94
      %s97 = sphi 0, %s96
      %s111 = sphi 0, %s97
      %s115 = sphi 0, %s115
      %s117 = sphi 0, %s115
      %s118 = sphi 0, %s117
      %s132 = sphi 0, %s118
      %s136 = sphi 0, %s136
      %s138 = sphi 0, %s136
      %s139 = sphi 0, %s138
      %s153 = sphi 0, %s139
      %s159 = sphi 0, %s161
      %s162 = sphi 0, %s159
      %s163 = sphi 0, %s162
      %s179 = sphi 0, %s163
    $region4: #{tpu_custom_call.1} parent=1 // loop_header_branch
      %21 = sbr.rel (%p19) target = $region8
    $region5: #{tpu_custom_call.1} parent=1 // loop_body
      %s23 = ssub.s32 %s18, 1
      %s24 = ssub.s32 %s18, 2
      %s25 = sadd.s32 %s18, 1
      %s26 = ssub.s32 %s18, %s25
      %p27 = scmp.eq.s32.totalorder %s26, 0
      %s29 = sadd.s32 %s28, 1
      %s30 = scalar_select %p27, %s28, %s29
      %p33 = pneg %p27
      %p34 = scmp.eq.s32.totalorder %s18, 1
      %p35 = por %p33, %p34
      %p36 = scmp.ne.s32.totalorder %s28, %s31
      %p37 = scmp.eq.s32.totalorder %s18, 0
      %p38 = por %p36, %p37
      %p39 = scmp.ne.s32.totalorder %s28, %s31
      %p40 = scmp.eq.s32.totalorder %s23, 1
      %p41 = por %p39, %p40
      %p42 = scmp.ne.s32.totalorder %s31, %s32
      %p43 = scmp.eq.s32.totalorder %s23, 0
      %p44 = por %p42, %p43
      %p45 = scmp.ne.s32.totalorder %s31, %s32
      %p46 = scmp.eq.s32.totalorder %s24, 1
      %p47 = por %p45, %p46
      %p49 = scmp.ne.s32.totalorder %s32, %s48
      %p50 = scmp.eq.s32.totalorder %s24, 0
      %p51 = por %p49, %p50
      %s53 = sadd.s32 %s52, 1
      %p56 = scmp.eq.s32.totalorder %s18, 1
      %p57 = scmp.ne.s32.totalorder %s52, %s54
      %p58 = scmp.eq.s32.totalorder %s18, 0
      %p59 = por %p57, %p58
      %p60 = scmp.ne.s32.totalorder %s52, %s54
      %p61 = scmp.eq.s32.totalorder %s23, 1
      %p62 = por %p60, %p61
      %p63 = scmp.ne.s32.totalorder %s54, %s55
      %p64 = scmp.eq.s32.totalorder %s23, 0
      %p65 = por %p63, %p64
      %p66 = scmp.ne.s32.totalorder %s54, %s55
      %p67 = scmp.eq.s32.totalorder %s24, 1
      %p68 = por %p66, %p67
      %p70 = scmp.ne.s32.totalorder %s55, %s69
      %p71 = scmp.eq.s32.totalorder %s24, 0
      %p72 = por %p70, %p71
      %s74 = sadd.s32 %s73, 1
      %p77 = scmp.eq.s32.totalorder %s18, 1
      %p78 = scmp.ne.s32.totalorder %s73, %s75
      %p79 = scmp.eq.s32.totalorder %s18, 0
      %p80 = por %p78, %p79
      %p81 = scmp.ne.s32.totalorder %s73, %s75
      %p82 = scmp.eq.s32.totalorder %s23, 1
      %p83 = por %p81, %p82
      %p84 = scmp.ne.s32.totalorder %s75, %s76
      %p85 = scmp.eq.s32.totalorder %s23, 0
      %p86 = por %p84, %p85
      %p87 = scmp.ne.s32.totalorder %s75, %s76
      %p88 = scmp.eq.s32.totalorder %s24, 1
      %p89 = por %p87, %p88
      %p91 = scmp.ne.s32.totalorder %s76, %s90
      %p92 = scmp.eq.s32.totalorder %s24, 0
      %p93 = por %p91, %p92
      %s95 = sadd.s32 %s94, 1
      %p98 = scmp.eq.s32.totalorder %s18, 1
      %p99 = scmp.ne.s32.totalorder %s94, %s96
      %p100 = scmp.eq.s32.totalorder %s18, 0
      %p101 = por %p99, %p100
      %p102 = scmp.ne.s32.totalorder %s94, %s96
      %p103 = scmp.eq.s32.totalorder %s23, 1
      %p104 = por %p102, %p103
      %p105 = scmp.ne.s32.totalorder %s96, %s97
      %p106 = scmp.eq.s32.totalorder %s23, 0
      %p107 = por %p105, %p106
      %p108 = scmp.ne.s32.totalorder %s96, %s97
      %p109 = scmp.eq.s32.totalorder %s24, 1
      %p110 = por %p108, %p109
      %p112 = scmp.ne.s32.totalorder %s97, %s111
      %p113 = scmp.eq.s32.totalorder %s24, 0
      %p114 = por %p112, %p113
      %s116 = sadd.s32 %s115, 1
      %p119 = scmp.eq.s32.totalorder %s18, 1
      %p120 = scmp.ne.s32.totalorder %s115, %s117
      %p121 = scmp.eq.s32.totalorder %s18, 0
      %p122 = por %p120, %p121
      %p123 = scmp.ne.s32.totalorder %s115, %s117
      %p124 = scmp.eq.s32.totalorder %s23, 1
      %p125 = por %p123, %p124
      %p126 = scmp.ne.s32.totalorder %s117, %s118
      %p127 = scmp.eq.s32.totalorder %s23, 0
      %p128 = por %p126, %p127
      %p129 = scmp.ne.s32.totalorder %s117, %s118
      %p130 = scmp.eq.s32.totalorder %s24, 1
      %p131 = por %p129, %p130
      %p133 = scmp.ne.s32.totalorder %s118, %s132
      %p134 = scmp.eq.s32.totalorder %s24, 0
      %p135 = por %p133, %p134
      %s137 = sadd.s32 %s136, 1
      %p140 = scmp.eq.s32.totalorder %s18, 1
      %p141 = scmp.ne.s32.totalorder %s136, %s138
      %p142 = scmp.eq.s32.totalorder %s18, 0
      %p143 = por %p141, %p142
      %p144 = scmp.ne.s32.totalorder %s136, %s138
      %p145 = scmp.eq.s32.totalorder %s23, 1
      %p146 = por %p144, %p145
      %p147 = scmp.ne.s32.totalorder %s138, %s139
      %p148 = scmp.eq.s32.totalorder %s23, 0
      %p149 = por %p147, %p148
      %p150 = scmp.ne.s32.totalorder %s138, %s139
      %p151 = scmp.eq.s32.totalorder %s24, 1
      %p152 = por %p150, %p151
      %p154 = scmp.ne.s32.totalorder %s139, %s153
      %p155 = scmp.eq.s32.totalorder %s24, 0
      %p156 = por %p154, %p155
      %s157 = ssub.s32 %s18, %s25
      %p158 = scmp.eq.s32.totalorder %s157, 0
      %s160 = sadd.s32 %s159, 1
      %s161 = scalar_select %p158, %s159, %s160
      %p164 = pneg %p158
      %p165 = scmp.eq.s32.totalorder %s18, 1
      %p166 = por %p164, %p165
      %p167 = scmp.ne.s32.totalorder %s159, %s162
      %p168 = scmp.eq.s32.totalorder %s18, 0
      %p169 = por %p167, %p168
      %p170 = scmp.ne.s32.totalorder %s159, %s162
      %p171 = scmp.eq.s32.totalorder %s23, 1
      %p172 = por %p170, %p171
      %p173 = scmp.ne.s32.totalorder %s162, %s163
      %p174 = scmp.eq.s32.totalorder %s23, 0
      %p175 = por %p173, %p174
      %p176 = scmp.ne.s32.totalorder %s162, %s163
      %p177 = scmp.eq.s32.totalorder %s24, 1
      %p178 = por %p176, %p177
      %p180 = scmp.ne.s32.totalorder %s163, %s179
      %p181 = scmp.eq.s32.totalorder %s24, 0
      %p182 = por %p180, %p181
      %p183 = scmp.le.s32.totalorder 1, %s18
      %p184 = scmp.lt.s32.totalorder %s18, 3
      %p185 = pnand %p183, %p184
      %p186 = pneg %p185
      // Predicated region
      $region9: #{tpu_custom_call.1} parent=5 // pred_check
        _
      $region10: #{tpu_custom_call.1} parent=5 // pred_check_branch
        %188 = sbr.rel (%p185) target = $region12
      $region11: #{tpu_custom_call.1} parent=5 // pred_region
        %s189 = ssub.s32 %s18, 1
        // Predicated region
        $region13: #{tpu_custom_call.1} parent=11 // pred_check
          %p190 = pneg %p65
        $region14: #{tpu_custom_call.1} parent=11 // pred_check_branch
          %192 = sbr.rel (%p190) target = $region16
        $region15: #{tpu_custom_call.1} parent=11 // pred_region
          _
        $region16: #{tpu_custom_call.1} parent=11 // pred_fallthru
          _
        // Predicated region
        $region17: #{tpu_custom_call.1} parent=11 // pred_check
          %p193 = pneg %p86
        $region18: #{tpu_custom_call.1} parent=11 // pred_check_branch
          %195 = sbr.rel (%p193) target = $region20
        $region19: #{tpu_custom_call.1} parent=11 // pred_region
          _
        $region20: #{tpu_custom_call.1} parent=11 // pred_fallthru
          _
        // Predicated region
        $region21: #{tpu_custom_call.1} parent=11 // pred_check
          %p196 = pneg %p107
        $region22: #{tpu_custom_call.1} parent=11 // pred_check_branch
          %198 = sbr.rel (%p196) target = $region24
        $region23: #{tpu_custom_call.1} parent=11 // pred_region
          _
        $region24: #{tpu_custom_call.1} parent=11 // pred_fallthru
          _
        // Predicated region
        $region25: #{tpu_custom_call.1} parent=11 // pred_check
          %p199 = pneg %p128
        $region26: #{tpu_custom_call.1} parent=11 // pred_check_branch
          %201 = sbr.rel (%p199) target = $region28
        $region27: #{tpu_custom_call.1} parent=11 // pred_region
          _
        $region28: #{tpu_custom_call.1} parent=11 // pred_fallthru
          _
        // Predicated region
        $region29: #{tpu_custom_call.1} parent=11 // pred_check
          %p202 = pneg %p149
        $region30: #{tpu_custom_call.1} parent=11 // pred_check_branch
          %204 = sbr.rel (%p202) target = $region32
        $region31: #{tpu_custom_call.1} parent=11 // pred_region
          _
        $region32: #{tpu_custom_call.1} parent=11 // pred_fallthru
          _
      $region12: #{tpu_custom_call.1} parent=5 // pred_fallthru
        _
      %p205 = scmp.lt.s32.totalorder %s18, 2
      // Predicated region
      $region33: #{tpu_custom_call.1} parent=5 // pred_check
        %p206 = pneg %p205
      $region34: #{tpu_custom_call.1} parent=5 // pred_check_branch
        %208 = sbr.rel (%p206) target = $region36
      $region35: #{tpu_custom_call.1} parent=5 // pred_region
        // Predicated region
        $region37: #{tpu_custom_call.1} parent=35 // pred_check
          %p209 = pneg %p38
        $region38: #{tpu_custom_call.1} parent=35 // pred_check_branch
          %211 = sbr.rel (%p209) target = $region40
        $region39: #{tpu_custom_call.1} parent=35 // pred_region
          %s212 = sand.u32 %s28, 1
          %s213 = scalar_lea.sflag [#allocation5], %s212
          %s214 = sand.u32 %s28, 1
          %s215 = smul.addr %s214, 24
          %s216 = scalar_lea.vmem [#allocation4], %s215
          %218 = vsyncadd %s213, 0
          %s219 = smul.addr %s18, 3
          %s220 = smul.addr %s219, 8
          %s221 = scalar_lea.hbm %s0, %s220
          %s223 = sshll.u32 %s221, 4
          %s224 = int_to_ptr.hbm [resolvable:$true] %s223
          %s225 = sshll.u32 %s216, 4
          %s226 = int_to_ptr.vmem [resolvable:$true] %s225
          %228 = dma.hbm_to_vmem [thread:$0]  %s224, 384, %s226, %s213
        $region40: #{tpu_custom_call.1} parent=35 // pred_fallthru
          _
      $region36: #{tpu_custom_call.1} parent=5 // pred_fallthru
        _
      %p229 = scmp.le.s32.totalorder 1, %s18
      %p230 = scmp.lt.s32.totalorder %s18, 3
      %p231 = pnand %p229, %p230
      %p232 = pneg %p231
      // Predicated region
      $region41: #{tpu_custom_call.1} parent=5 // pred_check
        _
      $region42: #{tpu_custom_call.1} parent=5 // pred_check_branch
        %234 = sbr.rel (%p231) target = $region44
      $region43: #{tpu_custom_call.1} parent=5 // pred_region
        %s235 = ssub.s32 %s18, 1
        %s236 = sand.u32 %s31, 1
        %s237 = scalar_lea.sflag [#allocation5], %s236
        %s238 = sand.u32 %s31, 1
        %s239 = smul.addr %s238, 24
        %s240 = scalar_lea.vmem [#allocation4], %s239
        // Predicated region
        $region45: #{tpu_custom_call.1} parent=43 // pred_check
          %p241 = pneg %p44
        $region46: #{tpu_custom_call.1} parent=43 // pred_check_branch
          %243 = sbr.rel (%p241) target = $region48
        $region47: #{tpu_custom_call.1} parent=43 // pred_region
          %245 = dma.done %s237, 384
        $region48: #{tpu_custom_call.1} parent=43 // pred_fallthru
          _
        %s246 = sand.u32 %s31, 1
        %s247 = scalar_lea.sflag [#allocation5], %s246
        %s248 = sand.u32 %s31, 1
        %s249 = smul.addr %s248, 24
        %s250 = scalar_lea.vmem [#allocation4], %s249
        %p251 = pneg %p44
        %p252 = pneg %p41
        %p253 = pneg %p65
        %p254 = pneg %p62
        %p255 = pneg %p86
        %p256 = pneg %p83
        %p257 = pneg %p107
        %p258 = pneg %p104
        %p259 = pneg %p128
        %p260 = pneg %p125
        %p261 = pneg %p149
        %p262 = pneg %p146
        %p263 = pneg %p175
        %p264 = pneg %p172
        %s265 = sand.u32 %s162, 1
        %s266 = scalar_lea.sflag [#allocation6], %s265
        %s267 = sand.u32 %s162, 1
        %s268 = smul.addr %s267, 24
        %s269 = scalar_lea.vmem [#allocation7], %s268
        %v270 = vld [vmem:[%s240] sm:$0xff]
        %v271 = vld [vmem:[%s240 + $0x8] sm:$0xff]
        %v272 = vld [vmem:[%s240 + $0x10] sm:$0xff]
        %273 = vst [vmem:[#allocation3] sm:$0xff] %v270
        %274 = vst [vmem:[#allocation3 + $0x8] sm:$0xff] %v271
        %vm275 = vcmask 261120
        %276 = vst.msk [vmem:[#allocation3 + $0x10] sm:$0xff] %vm275, %v272
        %280 = vrot.lane.b32.xlu0 %v270, 127
        %v281 = vpop.permute.xlu0 %280
        %282 = vrot.lane.b32.xlu0 %v271, 127
        %v283 = vpop.permute.xlu0 %282
        %284 = vrot.lane.b32.xlu0 %v272, 127
        %v285 = vpop.permute.xlu0 %284
        %vm286 = vcmask 1039360
        %v287 = vsel %vm286, %v281, %v283
        %v288 = vsel %vm286, %v283, %v285
        %292 = vst [vmem:[#allocation3 + $0x18] sm:$0xff] %v287
        %293 = vst [vmem:[#allocation3 + $0x20] sm:$0xff] %v288
        %294 = vst.msk [vmem:[#allocation3 + $0x28] sm:$0xff] %vm275, %v285
        %295 = vrot.lane.b32.xlu0 %v270, 126
        %v296 = vpop.permute.xlu0 %295
        %297 = vrot.lane.b32.xlu0 %v271, 126
        %v298 = vpop.permute.xlu0 %297
        %299 = vrot.lane.b32.xlu0 %v272, 126
        %v300 = vpop.permute.xlu0 %299
        %vm301 = vcmask 1031168
        %v302 = vsel %vm301, %v296, %v298
        %v303 = vsel %vm301, %v298, %v300
        %307 = vst [vmem:[#allocation3 + $0x30] sm:$0xff] %v302
        %308 = vst [vmem:[#allocation3 + $0x38] sm:$0xff] %v303
        %309 = vst.msk [vmem:[#allocation3 + $0x40] sm:$0xff] %vm275, %v300
        %310 = vrot.lane.b32.xlu0 %v270, 110
        %v311 = vpop.permute.xlu0 %310
        %312 = vrot.lane.b32.xlu0 %v271, 110
        %v313 = vpop.permute.xlu0 %312
        %314 = vrot.lane.b32.xlu0 %v272, 110
        %v315 = vpop.permute.xlu0 %314
        %vm316 = vcmask 900096
        %v317 = vsel %vm316, %v311, %v313
        %v318 = vsel %vm316, %v313, %v315
        %322 = vst [vmem:[#allocation3 + $0x48] sm:$0xff] %v317
        %323 = vst [vmem:[#allocation3 + $0x50] sm:$0xff] %v318
        %324 = vst.msk [vmem:[#allocation3 + $0x58] sm:$0xff] %vm275, %v315
        %325 = vrot.lane.b32.xlu0 %v270, 109
        %v326 = vpop.permute.xlu0 %325
        %327 = vrot.lane.b32.xlu0 %v271, 109
        %v328 = vpop.permute.xlu0 %327
        %329 = vrot.lane.b32.xlu0 %v272, 109
        %v330 = vpop.permute.xlu0 %329
        %vm331 = vcmask 891904
        %v332 = vsel %vm331, %v326, %v328
        %v333 = vsel %vm331, %v328, %v330
        %337 = vst [vmem:[#allocation3 + $0x60] sm:$0xff] %v332
        %338 = vst [vmem:[#allocation3 + $0x68] sm:$0xff] %v333
        %339 = vst.msk [vmem:[#allocation3 + $0x70] sm:$0xff] %vm275, %v330
        %340 = vrot.lane.b32.xlu0 %v270, 108
        %v341 = vpop.permute.xlu0 %340
        %342 = vrot.lane.b32.xlu0 %v271, 108
        %v343 = vpop.permute.xlu0 %342
        %344 = vrot.lane.b32.xlu0 %v272, 108
        %v345 = vpop.permute.xlu0 %344
        %vm346 = vcmask 883712
        %v347 = vsel %vm346, %v341, %v343
        %v348 = vsel %vm346, %v343, %v345
        %352 = vst [vmem:[#allocation3 + $0x78] sm:$0xff] %v347
        %353 = vst [vmem:[#allocation3 + $0x80] sm:$0xff] %v348
        %354 = vst.msk [vmem:[#allocation3 + $0x88] sm:$0xff] %vm275, %v345
        %355 = vrot.lane.b32.xlu0 %v270, 92
        %v356 = vpop.permute.xlu0 %355
        %357 = vrot.lane.b32.xlu0 %v271, 92
        %v358 = vpop.permute.xlu0 %357
        %359 = vrot.lane.b32.xlu0 %v272, 92
        %v360 = vpop.permute.xlu0 %359
        %vm361 = vcmask 752640
        %v362 = vsel %vm361, %v356, %v358
        %v363 = vsel %vm361, %v358, %v360
        %367 = vst [vmem:[#allocation3 + $0x90] sm:$0xff] %v362
        %368 = vst [vmem:[#allocation3 + $0x98] sm:$0xff] %v363
        %369 = vst.msk [vmem:[#allocation3 + $0xa0] sm:$0xff] %vm275, %v360
        %370 = vrot.lane.b32.xlu0 %v270, 91
        %v371 = vpop.permute.xlu0 %370
        %372 = vrot.lane.b32.xlu0 %v271, 91
        %v373 = vpop.permute.xlu0 %372
        %374 = vrot.lane.b32.xlu0 %v272, 91
        %v375 = vpop.permute.xlu0 %374
        %vm376 = vcmask 744448
        %v377 = vsel %vm376, %v371, %v373
        %v378 = vsel %vm376, %v373, %v375
        %382 = vst [vmem:[#allocation3 + $0xa8] sm:$0xff] %v377
        %383 = vst [vmem:[#allocation3 + $0xb0] sm:$0xff] %v378
        %384 = vst.msk [vmem:[#allocation3 + $0xb8] sm:$0xff] %vm275, %v375
        %385 = vrot.lane.b32.xlu0 %v270, 90
        %v386 = vpop.permute.xlu0 %385
        %387 = vrot.lane.b32.xlu0 %v271, 90
        %v388 = vpop.permute.xlu0 %387
        %389 = vrot.lane.b32.xlu0 %v272, 90
        %v390 = vpop.permute.xlu0 %389
        %vm391 = vcmask 736256
        %v392 = vsel %vm391, %v386, %v388
        %v393 = vsel %vm391, %v388, %v390
        %397 = vst [vmem:[#allocation3 + $0xc0] sm:$0xff] %v392
        %398 = vst [vmem:[#allocation3 + $0xc8] sm:$0xff] %v393
        %399 = vst.msk [vmem:[#allocation3 + $0xd0] sm:$0xff] %vm275, %v390
        %v400 = vld [vmem:[%s1] sm:$0xff]
        %v401 = vld [vmem:[#allocation3] sm:$0xff]
        %v402 = vld [vmem:[#allocation3 + $0x8] sm:$0xff]
        %v403 = vld [vmem:[#allocation3 + $0x10] sm:$0xff]
        %v404 = vld [vmem:[#allocation3 + $0x18] sm:$0xff]
        %v405 = vld [vmem:[#allocation3 + $0x20] sm:$0xff]
        %v406 = vld [vmem:[#allocation3 + $0x28] sm:$0xff]
        %v407 = vld [vmem:[#allocation3 + $0x30] sm:$0xff]
        %v408 = vld [vmem:[#allocation3 + $0x38] sm:$0xff]
        %v409 = vld [vmem:[#allocation3 + $0x40] sm:$0xff]
        %v410 = vld [vmem:[#allocation3 + $0x48] sm:$0xff]
        %v411 = vld [vmem:[#allocation3 + $0x50] sm:$0xff]
        %v412 = vld [vmem:[#allocation3 + $0x58] sm:$0xff]
        %v413 = vld [vmem:[#allocation3 + $0x60] sm:$0xff]
        %v414 = vld [vmem:[#allocation3 + $0x68] sm:$0xff]
        %v415 = vld [vmem:[#allocation3 + $0x70] sm:$0xff]
        %v416 = vld [vmem:[#allocation3 + $0x78] sm:$0xff]
        %v417 = vld [vmem:[#allocation3 + $0x80] sm:$0xff]
        %v418 = vld [vmem:[#allocation3 + $0x88] sm:$0xff]
        %v419 = vld [vmem:[#allocation3 + $0x90] sm:$0xff]
        %v420 = vld [vmem:[#allocation3 + $0x98] sm:$0xff]
        %v421 = vld [vmem:[#allocation3 + $0xa0] sm:$0xff]
        %v422 = vld [vmem:[#allocation3 + $0xa8] sm:$0xff]
        %v423 = vld [vmem:[#allocation3 + $0xb0] sm:$0xff]
        %v424 = vld [vmem:[#allocation3 + $0xb8] sm:$0xff]
        %v425 = vld [vmem:[#allocation3 + $0xc0] sm:$0xff]
        %v426 = vld [vmem:[#allocation3 + $0xc8] sm:$0xff]
        %v427 = vld [vmem:[#allocation3 + $0xd0] sm:$0xff]
        %v428 = vld [vmem:[%s3] sm:$0xff]
        %430 = vset.pattern.permute.xlu0 0
        %431 = vperm.xlu0 %430, %v428
        %v432 = vpop.permute.xlu0 %431
        %vm434 = vcmask 588800
        %v436 = vsel %vm434, %v400, 0
        %438 = vmatpush.msra.mxu0 0.0
        %439 = vmatpush.msra.mxu0 0.0
        %440 = vmatpush.msra.mxu0 0.0
        %441 = vmatpush.msra.mxu0 0.0
        %442 = vmatpush.msra.mxu0 0.0
        %443 = vmatpush.msra.mxu0 0.0
        %444 = vmatpush.msra.mxu0 0.0
        %445 = vmatpush.msra.mxu0 %v425
        %446 = vmatpush.msra.mxu0 %v422
        %447 = vmatpush.msra.mxu0 %v419
        %448 = vmatpush.msra.mxu0 %v416
        %449 = vmatpush.msra.mxu0 %v413
        %450 = vmatpush.msra.mxu0 %v410
        %451 = vmatpush.msra.mxu0 %v407
        %452 = vmatpush.msra.mxu0 %v404
        %453 = vmatpush.msra.mxu0 %v401
        %454 = vmatmul.f32.gmra.mxu0 %v436
        %v455 = vpop.f32.mrf.mxu0
        %v456 = vadd.f32 %v432, %v455
        %457 = vdwg.mxu0
        %458 = vmatpush.msra.mxu0 0.0
        %459 = vmatpush.msra.mxu0 0.0
        %460 = vmatpush.msra.mxu0 0.0
        %461 = vmatpush.msra.mxu0 0.0
        %462 = vmatpush.msra.mxu0 0.0
        %463 = vmatpush.msra.mxu0 0.0
        %464 = vmatpush.msra.mxu0 0.0
        %465 = vmatpush.msra.mxu0 %v426
        %466 = vmatpush.msra.mxu0 %v423
        %467 = vmatpush.msra.mxu0 %v420
        %468 = vmatpush.msra.mxu0 %v417
        %469 = vmatpush.msra.mxu0 %v414
        %470 = vmatpush.msra.mxu0 %v411
        %471 = vmatpush.msra.mxu0 %v408
        %472 = vmatpush.msra.mxu0 %v405
        %473 = vmatpush.msra.mxu0 %v402
        %474 = vmatmul.f32.gmra.mxu0 %v436
        %v475 = vpop.f32.mrf.mxu0
        %v476 = vadd.f32 %v432, %v475
        %477 = vdwg.mxu0
        %478 = vmatpush.msra.mxu0 0.0
        %479 = vmatpush.msra.mxu0 0.0
        %480 = vmatpush.msra.mxu0 0.0
        %481 = vmatpush.msra.mxu0 0.0
        %482 = vmatpush.msra.mxu0 0.0
        %483 = vmatpush.msra.mxu0 0.0
        %484 = vmatpush.msra.mxu0 0.0
        %485 = vmatpush.msra.mxu0 %v427
        %486 = vmatpush.msra.mxu0 %v424
        %487 = vmatpush.msra.mxu0 %v421
        %488 = vmatpush.msra.mxu0 %v418
        %489 = vmatpush.msra.mxu0 %v415
        %490 = vmatpush.msra.mxu0 %v412
        %491 = vmatpush.msra.mxu0 %v409
        %492 = vmatpush.msra.mxu0 %v406
        %493 = vmatpush.msra.mxu0 %v403
        %494 = vmatmul.f32.gmra.mxu0 %v436
        %v495 = vpop.f32.mrf.mxu0
        %v496 = vadd.f32 %v432, %v495
        %497 = vdwg.mxu0
        %v498 = vmax.f32 %v456, 0.0
        %v499 = vmax.f32 %v476, 0.0
        %v500 = vmax.f32 %v496, 0.0
        %v501 = vld [vmem:[%s5] sm:$0x7]
        %v503 = vperm.slane %v501, 0
        %v504 = vperm.slane %v501, 1
        %v505 = vperm.slane %v501, 2
        %v509 = vmul.f32 %v498, %v503
        %v510 = vmul.f32 %v499, %v504
        %v511 = vmul.f32 %v500, %v505
        %vm512 = vcmask 154624
        %513 = vst.msk [vmem:[#allocation2] sm:$0xff] %vm512, 0.0
        %vm514 = vcmask 703896
        %515 = vst.msk [vmem:[#allocation2 + $0x10] sm:$0xff] %vm514, 0.0
        %519 = vrot.lane.b32.xlu0 %v509, 19
        %v520 = vpop.permute.xlu0 %519
        %521 = vrot.lane.b32.xlu0 %v510, 19
        %v522 = vpop.permute.xlu0 %521
        %523 = vrot.lane.b32.xlu0 %v511, 19
        %v524 = vpop.permute.xlu0 %523
        %v525 = vsel %vm512, %v520, %v522
        %v526 = vsel %vm512, %v522, %v524
        %vm530 = vcmask 1047704
        %531 = vst.msk [vmem:[#allocation2] sm:$0xff] %vm530, %v520
        %532 = vst [vmem:[#allocation2 + $0x8] sm:$0xff] %v525
        %vm533 = vcmask 416768
        %534 = vst.msk [vmem:[#allocation2 + $0x10] sm:$0xff] %vm533, %v526
        %v535 = vld [vmem:[#allocation2] sm:$0xff]
        %v536 = vld [vmem:[#allocation2 + $0x8] sm:$0xff]
        %v537 = vld [vmem:[#allocation2 + $0x10] sm:$0xff]
        %538 = vst [vmem:[#allocation3] sm:$0xff] %v535
        %539 = vst [vmem:[#allocation3 + $0x8] sm:$0xff] %v536
        %540 = vst.msk [vmem:[#allocation3 + $0x10] sm:$0xff] %vm275, %v537
        %544 = vrot.lane.b32.xlu0 %v535, 127
        %v545 = vpop.permute.xlu0 %544
        %546 = vrot.lane.b32.xlu0 %v536, 127
        %v547 = vpop.permute.xlu0 %546
        %548 = vrot.lane.b32.xlu0 %v537, 127
        %v549 = vpop.permute.xlu0 %548
        %v550 = vsel %vm286, %v545, %v547
        %v551 = vsel %vm286, %v547, %v549
        %555 = vst [vmem:[#allocation3 + $0x18] sm:$0xff] %v550
        %556 = vst [vmem:[#allocation3 + $0x20] sm:$0xff] %v551
        %557 = vst.msk [vmem:[#allocation3 + $0x28] sm:$0xff] %vm275, %v549
        %558 = vrot.lane.b32.xlu0 %v535, 126
        %v559 = vpop.permute.xlu0 %558
        %560 = vrot.lane.b32.xlu0 %v536, 126
        %v561 = vpop.permute.xlu0 %560
        %562 = vrot.lane.b32.xlu0 %v537, 126
        %v563 = vpop.permute.xlu0 %562
        %v564 = vsel %vm301, %v559, %v561
        %v565 = vsel %vm301, %v561, %v563
        %569 = vst [vmem:[#allocation3 + $0x30] sm:$0xff] %v564
        %570 = vst [vmem:[#allocation3 + $0x38] sm:$0xff] %v565
        %571 = vst.msk [vmem:[#allocation3 + $0x40] sm:$0xff] %vm275, %v563
        %572 = vrot.lane.b32.xlu0 %v535, 110
        %v573 = vpop.permute.xlu0 %572
        %574 = vrot.lane.b32.xlu0 %v536, 110
        %v575 = vpop.permute.xlu0 %574
        %576 = vrot.lane.b32.xlu0 %v537, 110
        %v577 = vpop.permute.xlu0 %576
        %v578 = vsel %vm316, %v573, %v575
        %v579 = vsel %vm316, %v575, %v577
        %583 = vst [vmem:[#allocation3 + $0x48] sm:$0xff] %v578
        %584 = vst [vmem:[#allocation3 + $0x50] sm:$0xff] %v579
        %585 = vst.msk [vmem:[#allocation3 + $0x58] sm:$0xff] %vm275, %v577
        %586 = vrot.lane.b32.xlu0 %v535, 109
        %v587 = vpop.permute.xlu0 %586
        %588 = vrot.lane.b32.xlu0 %v536, 109
        %v589 = vpop.permute.xlu0 %588
        %590 = vrot.lane.b32.xlu0 %v537, 109
        %v591 = vpop.permute.xlu0 %590
        %v592 = vsel %vm331, %v587, %v589
        %v593 = vsel %vm331, %v589, %v591
        %597 = vst [vmem:[#allocation3 + $0x60] sm:$0xff] %v592
        %598 = vst [vmem:[#allocation3 + $0x68] sm:$0xff] %v593
        %599 = vst.msk [vmem:[#allocation3 + $0x70] sm:$0xff] %vm275, %v591
        %600 = vrot.lane.b32.xlu0 %v535, 108
        %v601 = vpop.permute.xlu0 %600
        %602 = vrot.lane.b32.xlu0 %v536, 108
        %v603 = vpop.permute.xlu0 %602
        %604 = vrot.lane.b32.xlu0 %v537, 108
        %v605 = vpop.permute.xlu0 %604
        %v606 = vsel %vm346, %v601, %v603
        %v607 = vsel %vm346, %v603, %v605
        %611 = vst [vmem:[#allocation3 + $0x78] sm:$0xff] %v606
        %612 = vst [vmem:[#allocation3 + $0x80] sm:$0xff] %v607
        %613 = vst.msk [vmem:[#allocation3 + $0x88] sm:$0xff] %vm275, %v605
        %614 = vrot.lane.b32.xlu0 %v535, 92
        %v615 = vpop.permute.xlu0 %614
        %616 = vrot.lane.b32.xlu0 %v536, 92
        %v617 = vpop.permute.xlu0 %616
        %618 = vrot.lane.b32.xlu0 %v537, 92
        %v619 = vpop.permute.xlu0 %618
        %v620 = vsel %vm361, %v615, %v617
        %v621 = vsel %vm361, %v617, %v619
        %625 = vst [vmem:[#allocation3 + $0x90] sm:$0xff] %v620
        %626 = vst [vmem:[#allocation3 + $0x98] sm:$0xff] %v621
        %627 = vst.msk [vmem:[#allocation3 + $0xa0] sm:$0xff] %vm275, %v619
        %628 = vrot.lane.b32.xlu0 %v535, 91
        %v629 = vpop.permute.xlu0 %628
        %630 = vrot.lane.b32.xlu0 %v536, 91
        %v631 = vpop.permute.xlu0 %630
        %632 = vrot.lane.b32.xlu0 %v537, 91
        %v633 = vpop.permute.xlu0 %632
        %v634 = vsel %vm376, %v629, %v631
        %v635 = vsel %vm376, %v631, %v633
        %639 = vst [vmem:[#allocation3 + $0xa8] sm:$0xff] %v634
        %640 = vst [vmem:[#allocation3 + $0xb0] sm:$0xff] %v635
        %641 = vst.msk [vmem:[#allocation3 + $0xb8] sm:$0xff] %vm275, %v633
        %642 = vrot.lane.b32.xlu0 %v535, 90
        %v643 = vpop.permute.xlu0 %642
        %644 = vrot.lane.b32.xlu0 %v536, 90
        %v645 = vpop.permute.xlu0 %644
        %646 = vrot.lane.b32.xlu0 %v537, 90
        %v647 = vpop.permute.xlu0 %646
        %v648 = vsel %vm391, %v643, %v645
        %v649 = vsel %vm391, %v645, %v647
        %653 = vst [vmem:[#allocation3 + $0xc0] sm:$0xff] %v648
        %654 = vst [vmem:[#allocation3 + $0xc8] sm:$0xff] %v649
        %655 = vst.msk [vmem:[#allocation3 + $0xd0] sm:$0xff] %vm275, %v647
        %v656 = vld [vmem:[%s2] sm:$0xff]
        %v657 = vld [vmem:[#allocation3] sm:$0xff]
        %v658 = vld [vmem:[#allocation3 + $0x8] sm:$0xff]
        %v659 = vld [vmem:[#allocation3 + $0x10] sm:$0xff]
        %v660 = vld [vmem:[#allocation3 + $0x18] sm:$0xff]
        %v661 = vld [vmem:[#allocation3 + $0x20] sm:$0xff]
        %v662 = vld [vmem:[#allocation3 + $0x28] sm:$0xff]
        %v663 = vld [vmem:[#allocation3 + $0x30] sm:$0xff]
        %v664 = vld [vmem:[#allocation3 + $0x38] sm:$0xff]
        %v665 = vld [vmem:[#allocation3 + $0x40] sm:$0xff]
        %v666 = vld [vmem:[#allocation3 + $0x48] sm:$0xff]
        %v667 = vld [vmem:[#allocation3 + $0x50] sm:$0xff]
        %v668 = vld [vmem:[#allocation3 + $0x58] sm:$0xff]
        %v669 = vld [vmem:[#allocation3 + $0x60] sm:$0xff]
        %v670 = vld [vmem:[#allocation3 + $0x68] sm:$0xff]
        %v671 = vld [vmem:[#allocation3 + $0x70] sm:$0xff]
        %v672 = vld [vmem:[#allocation3 + $0x78] sm:$0xff]
        %v673 = vld [vmem:[#allocation3 + $0x80] sm:$0xff]
        %v674 = vld [vmem:[#allocation3 + $0x88] sm:$0xff]
        %v675 = vld [vmem:[#allocation3 + $0x90] sm:$0xff]
        %v676 = vld [vmem:[#allocation3 + $0x98] sm:$0xff]
        %v677 = vld [vmem:[#allocation3 + $0xa0] sm:$0xff]
        %v678 = vld [vmem:[#allocation3 + $0xa8] sm:$0xff]
        %v679 = vld [vmem:[#allocation3 + $0xb0] sm:$0xff]
        %v680 = vld [vmem:[#allocation3 + $0xb8] sm:$0xff]
        %v681 = vld [vmem:[#allocation3 + $0xc0] sm:$0xff]
        %v682 = vld [vmem:[#allocation3 + $0xc8] sm:$0xff]
        %v683 = vld [vmem:[#allocation3 + $0xd0] sm:$0xff]
        %v684 = vld [vmem:[%s4] sm:$0xff]
        %686 = vset.pattern.permute.xlu0 0
        %687 = vperm.xlu0 %686, %v684
        %v688 = vpop.permute.xlu0 %687
        %v691 = vsel %vm434, %v656, 0
        %693 = vmatpush.msra.mxu0 0.0
        %694 = vmatpush.msra.mxu0 0.0
        %695 = vmatpush.msra.mxu0 0.0
        %696 = vmatpush.msra.mxu0 0.0
        %697 = vmatpush.msra.mxu0 0.0
        %698 = vmatpush.msra.mxu0 0.0
        %699 = vmatpush.msra.mxu0 0.0
        %700 = vmatpush.msra.mxu0 %v681
        %701 = vmatpush.msra.mxu0 %v678
        %702 = vmatpush.msra.mxu0 %v675
        %703 = vmatpush.msra.mxu0 %v672
        %704 = vmatpush.msra.mxu0 %v669
        %705 = vmatpush.msra.mxu0 %v666
        %706 = vmatpush.msra.mxu0 %v663
        %707 = vmatpush.msra.mxu0 %v660
        %708 = vmatpush.msra.mxu0 %v657
        %709 = vmatmul.f32.gmra.mxu0 %v691
        %v710 = vpop.f32.mrf.mxu0
        %v711 = vadd.f32 %v688, %v710
        %712 = vdwg.mxu0
        %713 = vmatpush.msra.mxu0 0.0
        %714 = vmatpush.msra.mxu0 0.0
        %715 = vmatpush.msra.mxu0 0.0
        %716 = vmatpush.msra.mxu0 0.0
        %717 = vmatpush.msra.mxu0 0.0
        %718 = vmatpush.msra.mxu0 0.0
        %719 = vmatpush.msra.mxu0 0.0
        %720 = vmatpush.msra.mxu0 %v682
        %721 = vmatpush.msra.mxu0 %v679
        %722 = vmatpush.msra.mxu0 %v676
        %723 = vmatpush.msra.mxu0 %v673
        %724 = vmatpush.msra.mxu0 %v670
        %725 = vmatpush.msra.mxu0 %v667
        %726 = vmatpush.msra.mxu0 %v664
        %727 = vmatpush.msra.mxu0 %v661
        %728 = vmatpush.msra.mxu0 %v658
        %729 = vmatmul.f32.gmra.mxu0 %v691
        %v730 = vpop.f32.mrf.mxu0
        %v731 = vadd.f32 %v688, %v730
        %732 = vdwg.mxu0
        %733 = vmatpush.msra.mxu0 0.0
        %734 = vmatpush.msra.mxu0 0.0
        %735 = vmatpush.msra.mxu0 0.0
        %736 = vmatpush.msra.mxu0 0.0
        %737 = vmatpush.msra.mxu0 0.0
        %738 = vmatpush.msra.mxu0 0.0
        %739 = vmatpush.msra.mxu0 0.0
        %740 = vmatpush.msra.mxu0 %v683
        %741 = vmatpush.msra.mxu0 %v680
        %742 = vmatpush.msra.mxu0 %v677
        %743 = vmatpush.msra.mxu0 %v674
        %744 = vmatpush.msra.mxu0 %v671
        %745 = vmatpush.msra.mxu0 %v668
        %746 = vmatpush.msra.mxu0 %v665
        %747 = vmatpush.msra.mxu0 %v662
        %748 = vmatpush.msra.mxu0 %v659
        %749 = vmatmul.f32.gmra.mxu0 %v691
        %v750 = vpop.f32.mrf.mxu0
        %v751 = vadd.f32 %v688, %v750
        %752 = vdwg.mxu0
        %v753 = vadd.f32 %v711, %v332
        %v754 = vadd.f32 %v731, %v333
        %v755 = vadd.f32 %v751, %v330
        %v756 = vmax.f32 %v753, 0.0
        %v757 = vmax.f32 %v754, 0.0
        %v758 = vmax.f32 %v755, 0.0
        %759 = vst [vmem:[%s269] sm:$0xff] %v756
        %760 = vst [vmem:[%s269 + $0x8] sm:$0xff] %v757
        %761 = vst.msk [vmem:[%s269 + $0x10] sm:$0xff] %vm275, %v758
        %s762 = sand.u32 %s162, 1
        %s763 = scalar_lea.sflag [#allocation6], %s762
        %s764 = sand.u32 %s162, 1
        %s765 = smul.addr %s764, 24
        %s766 = scalar_lea.vmem [#allocation7], %s765
        // Predicated region
        $region49: #{tpu_custom_call.1} parent=43 // pred_check
          %p767 = pneg %p172
        $region50: #{tpu_custom_call.1} parent=43 // pred_check_branch
          %769 = sbr.rel (%p767) target = $region52
        $region51: #{tpu_custom_call.1} parent=43 // pred_region
          %771 = vsyncadd %s763, 0
          %s772 = smul.addr %s23, 3
          %s773 = smul.addr %s772, 8
          %s774 = scalar_lea.hbm %s6, %s773
          %s776 = sshll.u32 %s766, 4
          %s777 = int_to_ptr.vmem [resolvable:$true] %s776
          %s778 = sshll.u32 %s774, 4
          %s779 = int_to_ptr.hbm [resolvable:$true] %s778
          %781 = dma.vmem_to_hbm [thread:$0]  %s777, 384, %s779, %s763
        $region52: #{tpu_custom_call.1} parent=43 // pred_fallthru
          _
      $region44: #{tpu_custom_call.1} parent=5 // pred_fallthru
        _
      %p782 = scmp.le.s32.totalorder 2, %s18
      // Predicated region
      $region53: #{tpu_custom_call.1} parent=5 // pred_check
        %p783 = pneg %p782
      $region54: #{tpu_custom_call.1} parent=5 // pred_check_branch
        %785 = sbr.rel (%p783) target = $region56
      $region55: #{tpu_custom_call.1} parent=5 // pred_region
        %s786 = ssub.s32 %s18, 2
        // Predicated region
        $region57: #{tpu_custom_call.1} parent=55 // pred_check
          %p787 = pneg %p178
        $region58: #{tpu_custom_call.1} parent=55 // pred_check_branch
          %789 = sbr.rel (%p787) target = $region60
        $region59: #{tpu_custom_call.1} parent=55 // pred_region
          %s790 = sand.u32 %s163, 1
          %s791 = scalar_lea.sflag [#allocation6], %s790
          %s792 = sand.u32 %s163, 1
          %s793 = smul.addr %s792, 24
          %s794 = scalar_lea.vmem [#allocation7], %s793
          %796 = dma.done %s791, 384
        $region60: #{tpu_custom_call.1} parent=55 // pred_fallthru
          _
      $region56: #{tpu_custom_call.1} parent=5 // pred_fallthru
        _
    $region6: #{tpu_custom_call.1} parent=1 // loop_footer
      %s22 = sadd.s32 1, %s18
    $region7: #{tpu_custom_call.1} parent=1 // loop_footer_branch
      %17 = sbr.rel target = $region3
    $region8: #{tpu_custom_call.1} parent=1 // loop_exit
      _
    %797 = vsyncpa [#allocation5], 1
    %s798 = scalar_lea.sflag [#allocation5], 1
    %799 = vsyncpa %s798, 1
    %800 = vsyncpa [#allocation6], 1
    %s801 = scalar_lea.sflag [#allocation6], 1
    %802 = vsyncpa %s801, 1

</llo_original>
